<compile_context>
chip_gen: v7x
topology: tpu7x:2x2x1
jax: 0.10.0
libtpu: 0.0.40
codegen_flags: <defaults>
</compile_context>

<pallas_src>
import jax
import jax.numpy as jnp
from jax.experimental import pallas as pl
from jax.experimental.pallas import tpu as pltpu

IN_FEATURES = 16 + 64   # 80
OUT_FEATURES = 256


def bayesian_kernel(x_ref, w_ref, b_ref, o_ref):
    # x_ref: (TM, 80)  w_ref: (80, 256)  b_ref: (1, 256)  o_ref: (TM, 256)
    logits = (
        jnp.dot(x_ref[...], w_ref[...], preferred_element_type=jnp.float32)
        + b_ref[...]
    )
    # numerically-stable softmax over the last (feature) axis, exact normalization
    m = jnp.max(logits, axis=-1, keepdims=True)
    e = jnp.exp(logits - m)
    denom = jnp.sum(e, axis=-1, keepdims=True)
    o_ref[...] = (e / denom).astype(o_ref.dtype)


def _choose_tile(batch):
    """Batch tile: up to 2048 rows (~5.4 MiB double-buffered with weights,
    safe under every generation's scoped-VMEM default). Small batches round
    up to the sublane multiple (8)."""
    if batch >= 2048:
        return 2048
    return max(8, ((batch + 7) // 8) * 8)


def bayesian_forward(x, w, b, *, tile_m=None):
    """x: (B, 80) f32, w: (80, 256) f32, b: (256,) f32 -> (B, 256) f32"""
    B = x.shape[0]
    assert x.shape[1] == IN_FEATURES
    TM = tile_m if tile_m is not None else _choose_tile(B)
    grid = (pl.cdiv(B, TM),)

    cost = pl.CostEstimate(
        flops=2 * B * IN_FEATURES * OUT_FEATURES,
        transcendentals=B * OUT_FEATURES,
        bytes_accessed=B * 4 * (IN_FEATURES + OUT_FEATURES)
        + IN_FEATURES * OUT_FEATURES * 4
        + OUT_FEATURES * 4,
    )

    out = pl.pallas_call(
        bayesian_kernel,
        out_shape=jax.ShapeDtypeStruct((B, OUT_FEATURES), jnp.float32),
        grid_spec=pltpu.PrefetchScalarGridSpec(
            num_scalar_prefetch=0,
            grid=grid,
            in_specs=[
                # x: (TM, 80) block; last dim equals the full array dim -> legal
                pl.BlockSpec((TM, IN_FEATURES), lambda i: (i, 0)),
                # weight / bias: constant block index -> stay resident in VMEM
                pl.BlockSpec((IN_FEATURES, OUT_FEATURES), lambda i: (0, 0)),
                pl.BlockSpec((1, OUT_FEATURES), lambda i: (0, 0)),
            ],
            out_specs=pl.BlockSpec((TM, OUT_FEATURES), lambda i: (i, 0)),
        ),
        compiler_params=pltpu.CompilerParams(
            dimension_semantics=("parallel",)
        ),
        cost_estimate=cost,
    )(x, w, b.reshape(1, OUT_FEATURES))
    return out


def reference_forward(x, w, b):
    logits = x @ w + b
    return jax.nn.softmax(logits, axis=-1)


if __name__ == "__main__":
    key = jax.random.PRNGKey(0)
    kx, kw, kb, kx2 = jax.random.split(key, 4)

    # deterministic parameters (mimicking nn.Linear's uniform init scale)
    bound = 1.0 / (IN_FEATURES ** 0.5)
    w = jax.random.uniform(kw, (IN_FEATURES, OUT_FEATURES), jnp.float32, -bound, bound)
    b = jax.random.uniform(kb, (OUT_FEATURES,), jnp.float32, -bound, bound)

    # --- small batch (single tile) ---
    B = 8
    x = jax.random.normal(kx, (B, IN_FEATURES), jnp.float32)
    out = jax.block_until_ready(bayesian_forward(x, w, b))
    ref = reference_forward(x, w, b)
    assert out.shape == (B, OUT_FEATURES)
    assert jnp.allclose(out, ref, atol=2e-4, rtol=2e-4), "mismatch vs reference (B=8)"
    assert jnp.allclose(jnp.sum(out, axis=-1), 1.0, atol=1e-4), "rows must sum to 1"

    # --- multi-tile batch with a ragged tail (exercises masked final block) ---
    B2 = 200
    x2 = jax.random.normal(kx2, (B2, IN_FEATURES), jnp.float32)
    out2 = jax.block_until_ready(bayesian_forward(x2, w, b, tile_m=64))
    ref2 = reference_forward(x2, w, b)
    assert out2.shape == (B2, OUT_FEATURES)
    assert jnp.allclose(out2, ref2, atol=2e-4, rtol=2e-4), "mismatch vs reference (B=200)"
    assert jnp.allclose(jnp.sum(out2, axis=-1), 1.0, atol=1e-4), "rows must sum to 1"

    print("KERNEL_OK")
</pallas_src>

<mosaic_0001>
module attributes {stable_mosaic.version = 11 : i64} {
  func.func @bayesian_kernel(%arg0: i32, %arg1: memref<8x80xf32, #tpu.memory_space<vmem>>, %arg2: memref<80x256xf32, #tpu.memory_space<vmem>>, %arg3: memref<1x256xf32, #tpu.memory_space<vmem>>, %arg4: memref<8x256xf32, #tpu.memory_space<vmem>>) attributes {dimension_semantics = [#tpu.dimension_semantics<parallel>], iteration_bounds = array<i64: 1>, scalar_prefetch = 0 : i64, scratch_operands = 0 : i64, tpu.core_type = #tpu.core_type<tc>, window_params = [{transform_indices = @transform_0, window_bounds = array<i64: 8, 80>}, {pipeline_mode = #tpu.pipeline_mode<synchronous>, transform_indices = @transform_1, window_bounds = array<i64: 80, 256>}, {pipeline_mode = #tpu.pipeline_mode<synchronous>, transform_indices = @transform_2, window_bounds = array<i64: 1, 256>}, {transform_indices = @transform_3, window_bounds = array<i64: 8, 256>}]} {
    %c0 = arith.constant 0 : index
    %c0_0 = arith.constant 0 : index
    %0 = vector.load %arg1[%c0, %c0_0] : memref<8x80xf32, #tpu.memory_space<vmem>>, vector<8x80xf32>
    %c0_1 = arith.constant 0 : index
    %c0_2 = arith.constant 0 : index
    %1 = vector.load %arg2[%c0_1, %c0_2] : memref<80x256xf32, #tpu.memory_space<vmem>>, vector<80x256xf32>
    %cst = arith.constant dense<0.000000e+00> : vector<8x256xf32>
    %2 = tpu.matmul %0, %1, %cst {dimension_numbers = #tpu.dot_dimension_numbers<[1], [0], [0], [1], [0, 0, 1, 1], [], []>} : vector<8x80xf32>, vector<80x256xf32>, vector<8x256xf32> -> vector<8x256xf32>
    %c0_3 = arith.constant 0 : index
    %c0_4 = arith.constant 0 : index
    %3 = vector.load %arg3[%c0_3, %c0_4] : memref<1x256xf32, #tpu.memory_space<vmem>>, vector<1x256xf32>
    %4 = vector.broadcast %3 : vector<1x256xf32> to vector<8x256xf32>
    %5 = arith.addf %2, %4 : vector<8x256xf32>
    %cst_5 = arith.constant dense<0xFF800000> : vector<8xf32>
    %6 = vector.multi_reduction <maximumf>, %5, %cst_5 [1] : vector<8x256xf32> to vector<8xf32>
    %7 = vector.shape_cast %6 : vector<8xf32> to vector<8x1xf32>
    %8 = vector.broadcast %7 : vector<8x1xf32> to vector<8x256xf32>
    %9 = arith.subf %5, %8 : vector<8x256xf32>
    %10 = math.exp %9 : vector<8x256xf32>
    %cst_6 = arith.constant dense<0.000000e+00> : vector<8xf32>
    %11 = vector.multi_reduction <add>, %10, %cst_6 [1] : vector<8x256xf32> to vector<8xf32>
    %12 = vector.shape_cast %11 : vector<8xf32> to vector<8x1xf32>
    %13 = vector.broadcast %12 : vector<8x1xf32> to vector<8x256xf32>
    %14 = arith.divf %10, %13 : vector<8x256xf32>
    %c0_7 = arith.constant 0 : index
    %c0_8 = arith.constant 0 : index
    %15 = vector.load %arg4[%c0_7, %c0_8] : memref<8x256xf32, #tpu.memory_space<vmem>>, vector<8x256xf32>
    tpu.vector_store %arg4[%c0_7, %c0_8], %14 {strides = array<i32>} : memref<8x256xf32, #tpu.memory_space<vmem>>, vector<8x256xf32>,
    return
  }
  func.func @transform_0(%arg0: i32) -> (i32, i32) {
    %c0_i32 = arith.constant 0 : i32
    %c0_i32_0 = arith.constant 0 : i32
    return %arg0, %c0_i32 : i32, i32
  }
  func.func @transform_1(%arg0: i32) -> (i32, i32) {
    %c0_i32 = arith.constant 0 : i32
    %c0_i32_0 = arith.constant 0 : i32
    %c0_i32_1 = arith.constant 0 : i32
    return %c0_i32, %c0_i32_0 : i32, i32
  }
  func.func @transform_2(%arg0: i32) -> (i32, i32) {
    %c0_i32 = arith.constant 0 : i32
    %c0_i32_0 = arith.constant 0 : i32
    %c0_i32_1 = arith.constant 0 : i32
    return %c0_i32, %c0_i32_0 : i32, i32
  }
  func.func @transform_3(%arg0: i32) -> (i32, i32) {
    %c0_i32 = arith.constant 0 : i32
    %c0_i32_0 = arith.constant 0 : i32
    return %arg0, %c0_i32 : i32, i32
  }
}

</mosaic_0001>

<llo_original>
// kernel: tpu_custom_call.1
$region0: #{tpu_custom_call.1}
  #allocation0 [shape = 'u32[]', space=smem, size = 0x4, offset = 0x4, fixed_abs, tag = 'smem constant byte address 0x4 - core index']
  #allocation1 [shape = 'u32[144,128]{1,0:T(1,128)}', space=vmem, size = 0x12000, scoped, tag = 'internal scratch']
  %s0 = inlined_call_operand.hbm [shape: f32[8,80], index: 0, kind: input, shape index: {}]
  %s1 = inlined_call_operand.hbm [shape: f32[80,256], index: 1, kind: input, shape index: {}]
  %s2 = inlined_call_operand.vmem [shape: f32[1,256], index: 2, kind: input, shape index: {}]
  %s3 = inlined_call_operand.hbm [shape: f32[8,256], index: 3, kind: output, shape index: {}]
  %s4 = sld [smem:[#allocation0]]
  $region30: #{tpu_custom_call.1} parent=0
    _
  %s6 = ssub.s32 1, %s4
  %s7 = scalar_select 0, %s6, %s4
  $region1: #{tpu_custom_call.1} parent=0
    #allocation2 [shape = 'u8[4096]{0}', space=vmem, size = 0x1000, scoped, tag = 'input window, operand 0, single buffered']
    #allocation3 [shape = 's32[1]{0}', space=sflag, size = 0x4, scoped, tag = 'scoped memory for tpu_custom_call.1']
    #allocation4 [shape = 's32[1]{0}', space=sflag, size = 0x4, scoped, tag = 'scoped memory for tpu_custom_call.1']
    #allocation5 [shape = 'u8[81920]{0}', space=vmem, size = 0x14000, scoped, tag = 'input window, operand 1, single buffered']
    #allocation6 [shape = 's32[1]{0}', space=sflag, size = 0x4, scoped, tag = 'scoped memory for tpu_custom_call.1']
    #allocation7 [shape = 'u8[8192]{0}', space=vmem, size = 0x2000, scoped, tag = 'output window, operand 0, single buffered']
    %8 = vsyncpa [#allocation3], 0
    %9 = vsyncpa [#allocation6], 0
    %10 = vsyncpa [#allocation4], 0
    // Predicated region
    $region2: #{tpu_custom_call.1} parent=1 // pred_check
      _
    $region3: #{tpu_custom_call.1} parent=1 // pred_check_branch
      %12 = sbr.rel (0) target = $region5
    $region4: #{tpu_custom_call.1} parent=1 // pred_region
      %s14 = ssub.s32 128, 128
      %15 = vsyncadd [#allocation3], %s14
      %s17 = sshll.u32 [#allocation2], 4
      %s18 = int_to_ptr.vmem [resolvable:$true] %s17
      %20 = dma.hbm_to_vmem [thread:$0]  %s0, 128, %s18, [#allocation3]
    $region5: #{tpu_custom_call.1} parent=1 // pred_fallthru
      _
    // Predicated region
    $region6: #{tpu_custom_call.1} parent=1 // pred_check
      _
    $region7: #{tpu_custom_call.1} parent=1 // pred_check_branch
      %22 = sbr.rel (0) target = $region9
    $region8: #{tpu_custom_call.1} parent=1 // pred_region
      %s24 = ssub.s32 2560, 2560
      %25 = vsyncadd [#allocation6], %s24
      %s26 = sshll.u32 [#allocation5], 4
      %s27 = int_to_ptr.vmem [resolvable:$true] %s26
      %32 = dma.hbm_to_vmem [thread:$0]  %s1, 2560, %s27, [#allocation6], 256, 256, 16
    $region9: #{tpu_custom_call.1} parent=1 // pred_fallthru
      _
    // Predicated region
    $region10: #{tpu_custom_call.1} parent=1 // pred_check
      _
    $region11: #{tpu_custom_call.1} parent=1 // pred_check_branch
      %34 = sbr.rel (0) target = $region13
    $region12: #{tpu_custom_call.1} parent=1 // pred_region
      _
    $region13: #{tpu_custom_call.1} parent=1 // pred_fallthru
      _
    // Predicated region
    $region14: #{tpu_custom_call.1} parent=1 // pred_check
      _
    $region15: #{tpu_custom_call.1} parent=1 // pred_check_branch
      %36 = sbr.rel (0) target = $region17
    $region16: #{tpu_custom_call.1} parent=1 // pred_region
      %37 = dma.done [#allocation3], 128
    $region17: #{tpu_custom_call.1} parent=1 // pred_fallthru
      _
    // Predicated region
    $region18: #{tpu_custom_call.1} parent=1 // pred_check
      _
    $region19: #{tpu_custom_call.1} parent=1 // pred_check_branch
      %39 = sbr.rel (0) target = $region21
    $region20: #{tpu_custom_call.1} parent=1 // pred_region
      %40 = dma.done [#allocation6], 2560
    $region21: #{tpu_custom_call.1} parent=1 // pred_fallthru
      _
    %v41 = vld [vmem:[#allocation2] sm:$0xff]
    %v42 = vld [vmem:[#allocation5] sm:$0xff]
    %v43 = vld [vmem:[#allocation5 + $0x8] sm:$0xff]
    %v44 = vld [vmem:[#allocation5 + $0x10] sm:$0xff]
    %v45 = vld [vmem:[#allocation5 + $0x18] sm:$0xff]
    %v46 = vld [vmem:[#allocation5 + $0x20] sm:$0xff]
    %v47 = vld [vmem:[#allocation5 + $0x28] sm:$0xff]
    %v48 = vld [vmem:[#allocation5 + $0x30] sm:$0xff]
    %v49 = vld [vmem:[#allocation5 + $0x38] sm:$0xff]
    %v50 = vld [vmem:[#allocation5 + $0x40] sm:$0xff]
    %v51 = vld [vmem:[#allocation5 + $0x48] sm:$0xff]
    %v52 = vld [vmem:[#allocation5 + $0x50] sm:$0xff]
    %v53 = vld [vmem:[#allocation5 + $0x58] sm:$0xff]
    %v54 = vld [vmem:[#allocation5 + $0x60] sm:$0xff]
    %v55 = vld [vmem:[#allocation5 + $0x68] sm:$0xff]
    %v56 = vld [vmem:[#allocation5 + $0x70] sm:$0xff]
    %v57 = vld [vmem:[#allocation5 + $0x78] sm:$0xff]
    %v58 = vld [vmem:[#allocation5 + $0x80] sm:$0xff]
    %v59 = vld [vmem:[#allocation5 + $0x88] sm:$0xff]
    %v60 = vld [vmem:[#allocation5 + $0x90] sm:$0xff]
    %v61 = vld [vmem:[#allocation5 + $0x98] sm:$0xff]
    %v62 = vld [vmem:[%s2] sm:$0x3]
    %v64 = vlaneseq
    %v65 = vshrl.u32 %v64, 7
    %v66 = vsub.s32 0, %v65
    %v67 = vrot.slane %v62, %v66
    %v68 = vlaneseq
    %v69 = vshrl.u32 %v68, 7
    %v70 = vsub.s32 1, %v69
    %v71 = vrot.slane %v62, %v70
    %vm74 = vcmask 654336
    %v76 = vsel %vm74, %v41, 0
    %78 = vmatprep.subr.mxu0 %v43
    %79 = vmatpush1.msra.mxu0 %v42
    %80 = vmatprep.subr.mxu0 %v45
    %81 = vmatpush1.msra.mxu0 %v44
    %82 = vmatprep.subr.mxu0 %v47
    %83 = vmatpush1.msra.mxu0 %v46
    %84 = vmatprep.subr.mxu0 %v49
    %85 = vmatpush1.msra.mxu0 %v48
    %86 = vmatprep.subr.mxu0 %v51
    %87 = vmatpush1.msra.mxu0 %v50
    %88 = vmatprep.subr.mxu0 %v53
    %89 = vmatpush1.msra.mxu0 %v52
    %90 = vmatprep.subr.mxu0 %v55
    %91 = vmatpush1.msra.mxu0 %v54
    %92 = vmatprep.subr.mxu0 %v57
    %93 = vmatpush1.msra.mxu0 %v56
    %94 = vmatprep.subr.mxu0 %v59
    %95 = vmatpush1.msra.mxu0 %v58
    %96 = vmatprep.subr.mxu0 %v61
    %97 = vmatpush1.msra.mxu0 %v60
    %98 = vmatprep.subr.mxu0 0.0
    %99 = vmatpush1.msra.mxu0 0.0
    %100 = vmatprep.subr.mxu0 0.0
    %101 = vmatpush1.msra.mxu0 0.0
    %102 = vmatprep.subr.mxu0 0.0
    %103 = vmatpush1.msra.mxu0 0.0
    %104 = vmatprep.subr.mxu0 0.0
    %105 = vmatpush1.msra.mxu0 0.0
    %106 = vmatprep.subr.mxu0 0.0
    %107 = vmatpush1.msra.mxu0 0.0
    %108 = vmatprep.subr.mxu0 0.0
    %109 = vmatpush1.msra.mxu0 0.0
    %110 = vmatprep.subr.mxu0 0.0
    %111 = vmatpush1.msra.mxu0 0.0
    %112 = vmatprep.subr.mxu0 0.0
    %113 = vmatpush1.msra.mxu0 0.0
    %114 = vmatprep.subr.mxu0 0.0
    %115 = vmatpush1.msra.mxu0 0.0
    %116 = vmatprep.subr.mxu0 0.0
    %117 = vmatpush1.msra.mxu0 0.0
    %118 = vmatprep.subr.mxu0 0.0
    %119 = vmatpush1.msra.mxu0 0.0
    %120 = vmatprep.subr.mxu0 0.0
    %121 = vmatpush1.msra.mxu0 0.0
    %122 = vmatprep.subr.mxu0 0.0
    %123 = vmatpush1.msra.mxu0 0.0
    %124 = vmatprep.subr.mxu0 0.0
    %125 = vmatpush1.msra.mxu0 0.0
    %126 = vmatprep.subr.mxu0 0.0
    %127 = vmatpush1.msra.mxu0 0.0
    %128 = vmatprep.subr.mxu0 0.0
    %129 = vmatpush1.msra.mxu0 0.0
    %130 = vmatprep.subr.mxu0 0.0
    %131 = vmatpush1.msra.mxu0 0.0
    %132 = vmatprep.subr.mxu0 0.0
    %133 = vmatpush1.msra.mxu0 0.0
    %134 = vmatprep.subr.mxu0 0.0
    %135 = vmatpush1.msra.mxu0 0.0
    %136 = vmatprep.subr.mxu0 0.0
    %137 = vmatpush1.msra.mxu0 0.0
    %138 = vmatprep.subr.mxu0 0.0
    %139 = vmatpush1.msra.mxu0 0.0
    %140 = vmatprep.subr.mxu0 0.0
    %141 = vmatpush1.msra.mxu0 0.0
    %142 = vmatprep.mubr.f32.mxu0 0.0
    %143 = vmatmul.mubr.f32.gmra.mrb[0].mxu0 %v76
    %v144 = vpop.f32.mrb[0].mxu0
    %v145 = vadd.f32 %v67, %v144
    %v146 = vpop.f32.mrb[0].mxu0
    %v147 = vadd.f32 %v71, %v146
    %148 = vdwg.mxu0
    %v149 = vmax.f32 %v145, %v147
    %150 = vmax.xlane.f32.xlu0 %v149
    %v151 = vpop.xlane.xlu0 %150
    %v152 = vsub.f32 %v145, %v151
    %v153 = vsub.f32 %v147, %v151
    %v154 = vmul.f32 %v152, 1.442695
    %v155 = vpow.pop %v154
    %v156 = vmul.f32 %v153, 1.442695
    %v157 = vpow.pop %v156
    %v158 = vadd.f32 %v155, %v157
    %159 = vadd.xlane.f32.xlu0 %v158
    %v160 = vpop.xlane.xlu0 %159
    %v161 = vrcp.pop %v160
    %v162 = vmul.f32 %v155, %v161
    %v163 = vmul.f32 %v157, %v161
    %164 = vst [vmem:[#allocation7] sm:$0xff] %v162
    %165 = vst [vmem:[#allocation7 + $0x8] sm:$0xff] %v163
    // Predicated region
    $region22: #{tpu_custom_call.1} parent=1 // pred_check
      _
    $region23: #{tpu_custom_call.1} parent=1 // pred_check_branch
      %167 = sbr.rel (0) target = $region25
    $region24: #{tpu_custom_call.1} parent=1 // pred_region
      %s169 = ssub.s32 256, 256
      %170 = vsyncadd [#allocation4], %s169
      %s172 = sshll.u32 [#allocation7], 4
      %s173 = int_to_ptr.vmem [resolvable:$true] %s172
      %175 = dma.vmem_to_hbm [thread:$0]  %s173, 256, %s3, [#allocation4]
    $region25: #{tpu_custom_call.1} parent=1 // pred_fallthru
      _
    // Predicated region
    $region26: #{tpu_custom_call.1} parent=1 // pred_check
      _
    $region27: #{tpu_custom_call.1} parent=1 // pred_check_branch
      %177 = sbr.rel (0) target = $region29
    $region28: #{tpu_custom_call.1} parent=1 // pred_region
      %178 = dma.done [#allocation4], 256
    $region29: #{tpu_custom_call.1} parent=1 // pred_fallthru
      _
    %179 = vsyncpa [#allocation3], 1
    %180 = vsyncpa [#allocation6], 1
    %181 = vsyncpa [#allocation4], 1

</llo_original>
